<compile_context>
chip_gen: v6e
topology: v6e:2x2x1
jax: 0.10.0
libtpu: 0.0.40
codegen_flags: <defaults>
</compile_context>

<pallas_src>
import math

import jax
import jax.numpy as jnp
import numpy as np
from jax import lax
from jax.experimental import pallas as pl
from jax.experimental.pallas import tpu as pltpu

_MIN_COLS = 128            # want a lane-dense (>=128) last dim for the 2-D view
_BLOCK_ELEMS = 1 << 20     # ~4 MiB f32 of input per operand per block


def _cdiv(a, b):
    return -(-a // b)


def _make_kernel(total_rows, block_rows, acc_rows, need_mask):
    """Builds the kernel body with the (static) shape constants baked in."""

    def kernel(est_ref, ref_ref, acc_ref):
        i = pl.program_id(0)

        @pl.when(i == 0)
        def _init():
            acc_ref[...] = jnp.zeros_like(acc_ref)

        e = jnp.abs(est_ref[...].astype(jnp.float32))
        r = jnp.abs(ref_ref[...].astype(jnp.float32))
        # log(clamp((e-r)^2, 1e-6)) == 2*log(max(|e-r|, 1e-3)); the factor 2 is
        # folded into the final scale in the wrapper.
        logd = jnp.log(jnp.maximum(jnp.abs(e - r), jnp.float32(1e-3)))

        if need_mask:
            # Ragged tail block: rows past the end of the real array hold
            # unspecified data (possibly NaN/Inf); select them out (select, not
            # multiply, so garbage cannot propagate) before accumulating.
            valid = total_rows - i * block_rows
            row_idx = lax.broadcasted_iota(jnp.int32, logd.shape, 0)
            logd = jnp.where(row_idx < valid, logd, jnp.float32(0.0))

        rows, cols = logd.shape
        if rows == acc_rows:
            acc_ref[...] += logd
        else:
            # Split the sublane axis only (lanes untouched) -> layout-free
            # reshape; the axis-0 sum is pure VPU adds onto the resident
            # (acc_rows, cols) accumulator block.
            acc_ref[...] += jnp.sum(
                logd.reshape(rows // acc_rows, acc_rows, cols), axis=0)

    return kernel


def db_loss(estimated_spec, reference_spec, *, block_elems=_BLOCK_ELEMS):
    assert estimated_spec.shape == reference_spec.shape
    shape = estimated_spec.shape
    assert len(shape) >= 2, "dBLoss expects spectrogram-like inputs (>= 2 dims)"
    total = math.prod(shape)

    # ---- choose a free 2-D view (rows, cols): cols = smallest trailing-dim
    # product >= _MIN_COLS (lane-dense); rows = total // cols (exact).
    cols = None
    suffix = 1
    for d in reversed(shape):
        suffix *= d
        if suffix >= _MIN_COLS:
            cols = suffix
            break
    if cols is None:           # tiny input: a single (lane-sparse) row
        cols = total
    rows = total // cols

    max_cols = max(_MIN_COLS, block_elems // 16)
    if cols > max_cols:
        # Fallback (rare shapes only): flat (rows, 512) slab with a tiny
        # (< 512 element) tail pad.  est=1 / ref=0 padding contributes
        # log(max(|1-0|, 1e-3)) = 0 exactly, so the sum is unchanged.
        cols = 512
        rows = _cdiv(total, cols)
        pad = rows * cols - total
        est2 = jnp.pad(estimated_spec.reshape(-1), (0, pad),
                       constant_values=1.0).reshape(rows, cols)
        ref2 = jnp.pad(reference_spec.reshape(-1), (0, pad),
                       constant_values=0.0).reshape(rows, cols)
    else:
        est2 = estimated_spec.reshape(rows, cols)
        ref2 = reference_spec.reshape(rows, cols)

    # ---- row blocking: ~block_elems elements per block; block rows are a
    # multiple of 16 (bf16-safe) unless a single full-array block suffices.
    if rows * cols <= block_elems:
        block_rows = rows
    else:
        block_rows = max(16, (block_elems // cols) // 16 * 16)
    n_blocks = _cdiv(rows, block_rows)
    need_mask = (rows % block_rows) != 0
    acc_rows = 8 if block_rows % 8 == 0 else 1

    kernel = _make_kernel(rows, block_rows, acc_rows, need_mask)
    itemsize = int(estimated_spec.dtype.itemsize)

    partials = pl.pallas_call(
        kernel,
        out_shape=jax.ShapeDtypeStruct((acc_rows, cols), jnp.float32),
        grid_spec=pltpu.PrefetchScalarGridSpec(
            num_scalar_prefetch=0,
            grid=(n_blocks,),
            in_specs=[
                pl.BlockSpec((block_rows, cols), lambda i: (i, 0)),
                pl.BlockSpec((block_rows, cols), lambda i: (i, 0)),
            ],
            out_specs=pl.BlockSpec((acc_rows, cols), lambda i: (0, 0)),
        ),
        compiler_params=pltpu.CompilerParams(
            dimension_semantics=("arbitrary",),
            vmem_limit_bytes=48 * 1024 * 1024,
        ),
        cost_estimate=pl.CostEstimate(
            flops=5 * total,
            transcendentals=total,
            bytes_accessed=2 * total * itemsize + acc_rows * cols * 4,
        ),
    )(est2, ref2)

    # Single cheap cross-lane reduce + scale (factor 2 from the |err| rewrite).
    return jnp.sum(partials) * jnp.float32(2.0 / total)


def db_loss_reference(estimated_spec, reference_spec):
    err = jnp.abs(estimated_spec) - jnp.abs(reference_spec)
    return jnp.mean(jnp.mean(jnp.log(jnp.maximum(err ** 2, 1e-6)), axis=-2))


if __name__ == "__main__":
    key = jax.random.PRNGKey(0)
    k1, k2, k3, k4, k5, k6 = jax.random.split(key, 6)

    # (B, C, F, T) spectrogram-like inputs (values may be negative).
    x = jax.random.normal(k1, (2, 4, 16, 16), dtype=jnp.float32)
    y = jax.random.normal(k2, (2, 4, 16, 16), dtype=jnp.float32)
    loss = db_loss(x, y)
    jax.block_until_ready(loss)
    np.testing.assert_allclose(np.asarray(loss),
                               np.asarray(db_loss_reference(x, y)),
                               rtol=1e-5, atol=1e-5)

    # Extra coverage: ragged row count (single block, acc_rows=1 path).
    a = jax.random.normal(k3, (3, 5, 16, 16), dtype=jnp.float32)
    b = jax.random.normal(k4, (3, 5, 16, 16), dtype=jnp.float32)
    np.testing.assert_allclose(np.asarray(db_loss(a, b)),
                               np.asarray(db_loss_reference(a, b)),
                               rtol=1e-5, atol=1e-5)

    # Extra coverage: multi-block grid with a masked ragged tail block
    # (block size forced small for the test).
    c = jax.random.normal(k5, (2, 4, 48, 16), dtype=jnp.float32)
    d = jax.random.normal(k6, (2, 4, 48, 16), dtype=jnp.float32)
    np.testing.assert_allclose(np.asarray(db_loss(c, d, block_elems=16 * 256)),
                               np.asarray(db_loss_reference(c, d)),
                               rtol=1e-5, atol=1e-5)

    print("KERNEL_OK")
</pallas_src>

<mosaic_0001>
module attributes {stable_mosaic.version = 11 : i64} {
  func.func @kernel(%arg0: i32, %arg1: memref<8x256xf32, #tpu.memory_space<vmem>>, %arg2: memref<8x256xf32, #tpu.memory_space<vmem>>, %arg3: memref<8x256xf32, #tpu.memory_space<vmem>>) attributes {dimension_semantics = [#tpu.dimension_semantics<arbitrary>], iteration_bounds = array<i64: 1>, scalar_prefetch = 0 : i64, scratch_operands = 0 : i64, tpu.core_type = #tpu.core_type<tc>, window_params = [{transform_indices = @transform_0, window_bounds = array<i64: 8, 256>}, {transform_indices = @transform_1, window_bounds = array<i64: 8, 256>}, {pipeline_mode = #tpu.pipeline_mode<synchronous>, transform_indices = @transform_2, window_bounds = array<i64: 8, 256>}]} {
    %c0_i32 = arith.constant 0 : i32
    %0 = arith.cmpi eq, %arg0, %c0_i32 : i32
    %1 = arith.extui %0 : i1 to i32
    %c0_i32_0 = arith.constant 0 : i32
    %2 = arith.cmpi ne, %1, %c0_i32_0 : i32
    scf.if %2 {
      %cst_8 = arith.constant 0.000000e+00 : f32
      %15 = vector.broadcast %cst_8 : f32 to vector<8x256xf32>
      %c0_9 = arith.constant 0 : index
      %c0_10 = arith.constant 0 : index
      %16 = vector.load %arg3[%c0_9, %c0_10] : memref<8x256xf32, #tpu.memory_space<vmem>>, vector<8x256xf32>
      tpu.vector_store %arg3[%c0_9, %c0_10], %15 {strides = array<i32>} : memref<8x256xf32, #tpu.memory_space<vmem>>, vector<8x256xf32>,
    } else {
    }
    %c0 = arith.constant 0 : index
    %c0_1 = arith.constant 0 : index
    %3 = vector.load %arg1[%c0, %c0_1] : memref<8x256xf32, #tpu.memory_space<vmem>>, vector<8x256xf32>
    %4 = math.absf %3 : vector<8x256xf32>
    %c0_2 = arith.constant 0 : index
    %c0_3 = arith.constant 0 : index
    %5 = vector.load %arg2[%c0_2, %c0_3] : memref<8x256xf32, #tpu.memory_space<vmem>>, vector<8x256xf32>
    %6 = math.absf %5 : vector<8x256xf32>
    %7 = arith.subf %4, %6 : vector<8x256xf32>
    %8 = math.absf %7 : vector<8x256xf32>
    %cst = arith.constant 1.000000e-03 : f32
    %9 = vector.broadcast %cst : f32 to vector<8x256xf32>
    %10 = arith.maximumf %8, %9 : vector<8x256xf32>
    %11 = math.log %10 : vector<8x256xf32>
    %c0_4 = arith.constant 0 : index
    %c0_5 = arith.constant 0 : index
    %12 = vector.load %arg3[%c0_4, %c0_5] : memref<8x256xf32, #tpu.memory_space<vmem>>, vector<8x256xf32>
    %13 = arith.addf %12, %11 : vector<8x256xf32>
    %c0_6 = arith.constant 0 : index
    %c0_7 = arith.constant 0 : index
    %14 = vector.load %arg3[%c0_6, %c0_7] : memref<8x256xf32, #tpu.memory_space<vmem>>, vector<8x256xf32>
    tpu.vector_store %arg3[%c0_6, %c0_7], %13 {strides = array<i32>} : memref<8x256xf32, #tpu.memory_space<vmem>>, vector<8x256xf32>,
    return
  }
  func.func @transform_0(%arg0: i32) -> (i32, i32) {
    %c0_i32 = arith.constant 0 : i32
    %c0_i32_0 = arith.constant 0 : i32
    return %arg0, %c0_i32 : i32, i32
  }
  func.func @transform_1(%arg0: i32) -> (i32, i32) {
    %c0_i32 = arith.constant 0 : i32
    %c0_i32_0 = arith.constant 0 : i32
    return %arg0, %c0_i32 : i32, i32
  }
  func.func @transform_2(%arg0: i32) -> (i32, i32) {
    %c0_i32 = arith.constant 0 : i32
    %c0_i32_0 = arith.constant 0 : i32
    %c0_i32_1 = arith.constant 0 : i32
    return %c0_i32, %c0_i32_0 : i32, i32
  }
}

</mosaic_0001>

<llo_original>
// kernel: tpu_custom_call.1
$region0: #{tpu_custom_call.1}
  #allocation0 [shape = 'u32[]', space=smem, size = 0x4, offset = 0x4, fixed_abs, tag = 'smem constant byte address 0x4 - core index']
  #allocation1 [shape = 'u32[144,128]{1,0:T(1,128)}', space=vmem, size = 0x12000, scoped, tag = 'internal scratch']
  %s0 = inlined_call_operand.hbm [shape: f32[8,256], index: 0, kind: input, shape index: {}]
  %s1 = inlined_call_operand.hbm [shape: f32[8,256], index: 1, kind: input, shape index: {}]
  %s2 = inlined_call_operand.hbm [shape: f32[8,256], index: 2, kind: output, shape index: {}]
  %s3 = sld [smem:[#allocation0]]
  $region30: #{tpu_custom_call.1} parent=0
    _
  %s5 = ssub.s32 1, %s3
  %s6 = scalar_select 0, %s5, %s3
  $region1: #{tpu_custom_call.1} parent=0
    #allocation2 [shape = 'u8[8192]{0}', space=vmem, size = 0x2000, scoped, tag = 'input window, operand 0, single buffered']
    #allocation3 [shape = 's32[1]{0}', space=sflag, size = 0x4, scoped, tag = 'scoped memory for tpu_custom_call.1']
    #allocation4 [shape = 's32[1]{0}', space=sflag, size = 0x4, scoped, tag = 'scoped memory for tpu_custom_call.1']
    #allocation5 [shape = 'u8[8192]{0}', space=vmem, size = 0x2000, scoped, tag = 'input window, operand 1, single buffered']
    #allocation6 [shape = 's32[1]{0}', space=sflag, size = 0x4, scoped, tag = 'scoped memory for tpu_custom_call.1']
    #allocation7 [shape = 'u8[8192]{0}', space=vmem, size = 0x2000, scoped, tag = 'output window, operand 0, single buffered']
    %7 = vsyncpa [#allocation3], 0
    %8 = vsyncpa [#allocation6], 0
    %9 = vsyncpa [#allocation4], 0
    // Predicated region
    $region2: #{tpu_custom_call.1} parent=1 // pred_check
      _
    $region3: #{tpu_custom_call.1} parent=1 // pred_check_branch
      %11 = sbr.rel (0) target = $region5
    $region4: #{tpu_custom_call.1} parent=1 // pred_region
      %s13 = ssub.s32 256, 256
      %14 = vsyncadd [#allocation3], %s13
      %s16 = sshll.u32 [#allocation2], 4
      %s17 = int_to_ptr.vmem [resolvable:$true] %s16
      %19 = dma.hbm_to_vmem [thread:$0]  %s0, 256, %s17, [#allocation3]
    $region5: #{tpu_custom_call.1} parent=1 // pred_fallthru
      _
    // Predicated region
    $region6: #{tpu_custom_call.1} parent=1 // pred_check
      _
    $region7: #{tpu_custom_call.1} parent=1 // pred_check_branch
      %21 = sbr.rel (0) target = $region9
    $region8: #{tpu_custom_call.1} parent=1 // pred_region
      %s23 = ssub.s32 256, 256
      %24 = vsyncadd [#allocation6], %s23
      %s26 = sshll.u32 [#allocation5], 4
      %s27 = int_to_ptr.vmem [resolvable:$true] %s26
      %29 = dma.hbm_to_vmem [thread:$0]  %s1, 256, %s27, [#allocation6]
    $region9: #{tpu_custom_call.1} parent=1 // pred_fallthru
      _
    // Predicated region
    $region10: #{tpu_custom_call.1} parent=1 // pred_check
      _
    $region11: #{tpu_custom_call.1} parent=1 // pred_check_branch
      %31 = sbr.rel (0) target = $region13
    $region12: #{tpu_custom_call.1} parent=1 // pred_region
      %32 = dma.done [#allocation3], 256
    $region13: #{tpu_custom_call.1} parent=1 // pred_fallthru
      _
    // Predicated region
    $region14: #{tpu_custom_call.1} parent=1 // pred_check
      _
    $region15: #{tpu_custom_call.1} parent=1 // pred_check_branch
      %34 = sbr.rel (0) target = $region17
    $region16: #{tpu_custom_call.1} parent=1 // pred_region
      %35 = dma.done [#allocation6], 256
    $region17: #{tpu_custom_call.1} parent=1 // pred_fallthru
      _
    %p36 = scmp.eq.s32.totalorder 0, 0
    // Predicated region
    $region18: #{tpu_custom_call.1} parent=1 // pred_check
      %p37 = pneg %p36
    $region19: #{tpu_custom_call.1} parent=1 // pred_check_branch
      %39 = sbr.rel (%p37) target = $region21
    $region20: #{tpu_custom_call.1} parent=1 // pred_region
      %40 = vst [vmem:[#allocation7] sm:$0xff] 0.0
      %41 = vst [vmem:[#allocation7 + $0x8] sm:$0xff] 0.0
    $region21: #{tpu_custom_call.1} parent=1 // pred_fallthru
      _
    %v42 = vld [vmem:[#allocation2] sm:$0xff]
    %v43 = vld [vmem:[#allocation2 + $0x8] sm:$0xff]
    %v44 = vand.u32 2147483647, %v42
    %v45 = vand.u32 2147483647, %v43
    %v46 = vld [vmem:[#allocation5] sm:$0xff]
    %v47 = vld [vmem:[#allocation5 + $0x8] sm:$0xff]
    %v48 = vand.u32 2147483647, %v46
    %v49 = vand.u32 2147483647, %v47
    %v50 = vsub.f32 %v44, %v48
    %v51 = vsub.f32 %v45, %v49
    %v52 = vand.u32 2147483647, %v50
    %v53 = vand.u32 2147483647, %v51
    %v54 = vmax.f32 %v52, 0.001
    %v55 = vmax.f32 %v53, 0.001
    %v56 = vlog2.pop %v54
    %v57 = vmul.f32 %v56, 0.6931472
    %v58 = vlog2.pop %v55
    %v59 = vmul.f32 %v58, 0.6931472
    %v60 = vld [vmem:[#allocation7] sm:$0xff]
    %v61 = vld [vmem:[#allocation7 + $0x8] sm:$0xff]
    %v62 = vadd.f32 %v60, %v57
    %v63 = vadd.f32 %v61, %v59
    %64 = vst [vmem:[#allocation7] sm:$0xff] %v62
    %65 = vst [vmem:[#allocation7 + $0x8] sm:$0xff] %v63
    // Predicated region
    $region22: #{tpu_custom_call.1} parent=1 // pred_check
      _
    $region23: #{tpu_custom_call.1} parent=1 // pred_check_branch
      %67 = sbr.rel (0) target = $region25
    $region24: #{tpu_custom_call.1} parent=1 // pred_region
      %s69 = ssub.s32 256, 256
      %70 = vsyncadd [#allocation4], %s69
      %s72 = sshll.u32 [#allocation7], 4
      %s73 = int_to_ptr.vmem [resolvable:$true] %s72
      %75 = dma.vmem_to_hbm [thread:$0]  %s73, 256, %s2, [#allocation4]
    $region25: #{tpu_custom_call.1} parent=1 // pred_fallthru
      _
    // Predicated region
    $region26: #{tpu_custom_call.1} parent=1 // pred_check
      _
    $region27: #{tpu_custom_call.1} parent=1 // pred_check_branch
      %77 = sbr.rel (0) target = $region29
    $region28: #{tpu_custom_call.1} parent=1 // pred_region
      %78 = dma.done [#allocation4], 256
    $region29: #{tpu_custom_call.1} parent=1 // pred_fallthru
      _
    %79 = vsyncpa [#allocation3], 1
    %80 = vsyncpa [#allocation6], 1
    %81 = vsyncpa [#allocation4], 1

</llo_original>
